<compile_context>
chip_gen: v7x
topology: tpu7x:2x2x1
jax: 0.10.0
libtpu: 0.0.40
codegen_flags: <defaults>
</compile_context>

<pallas_src>
import functools

import jax
import jax.numpy as jnp
from jax.experimental import pallas as pl
from jax.experimental.pallas import tpu as pltpu

_SUB = 8  # seq rows folded per inner step (one sublane group of the leading dim)


def _round_up(x, m):
    return ((x + m - 1) // m) * m


def _cdiv(a, b):
    return (a + b - 1) // b


@functools.lru_cache(maxsize=1)
def _device_info():
    """Return (vmem_capacity_bytes, multi_tensorcore) with safe fallbacks."""
    try:
        kind = jax.local_devices()[0].device_kind.lower()
    except Exception:  # pragma: no cover - defensive
        kind = ""
    try:
        vmem_cap = int(pltpu.get_tpu_info().vmem_capacity_bytes)
    except Exception:
        vmem_cap = (64 << 20) if "7" in kind else (128 << 20)
    single_tc = any(m in kind for m in ("lite", "v5e", "v6e", "v6"))
    multi_tc = (not single_tc) and any(m in kind for m in ("v4", "v5p", "v5", "7"))
    return vmem_cap, multi_tc


def _plan_tiles(S, B, H, emb_itemsize, prob_itemsize, multi_tc, block_target):
    """Pick (TS, TB, TH) tile sizes. TB | B, TH | H; TB mult-of-8 or == B;
    TH mult-of-128 or == H."""
    # In-kernel math is f32, so size the minimal 8-row working set in f32.
    work_itemsize = max(emb_itemsize, 4)

    # --- hidden tile: prefer full H (contiguous HBM slab per block) ---
    th_divisors = [H]
    if H % 128 == 0:
        n = H // 128
        th_divisors = [128 * d for d in range(n, 0, -1) if n % d == 0]
    TH = th_divisors[-1]
    for th in th_divisors:
        if _SUB * _round_up(B, _SUB) * _round_up(th, 128) * work_itemsize <= block_target:
            TH = th
            break

    # --- batch tile: only shrink if a minimal full-B block still doesn't fit ---
    TB = B
    if (_SUB * _round_up(TB, _SUB) * _round_up(TH, 128) * work_itemsize > block_target
            and B % _SUB == 0 and B > _SUB):
        best = _SUB
        for d in range(_SUB, B, _SUB):
            if B % d != 0:
                continue
            if _SUB * d * _round_up(TH, 128) * work_itemsize <= block_target:
                best = d  # keep the largest divisor that fits
        TB = best

    # --- multi-TC: make sure the parallel axes have >= 2 tiles when possible ---
    if multi_tc and (H // TH) * (B // TB) < 2:
        if TH == H and H % 256 == 0:
            TH = H // 2
        elif TB == B and B % 16 == 0:
            TB = B // 2

    # --- seq tile: fill the per-block budget (emb + prob, padded layout) ---
    row_bytes = _round_up(TB, _SUB) * (_round_up(TH, 128) * emb_itemsize
                                       + 128 * prob_itemsize)
    ts = max(_SUB, (block_target // max(1, row_bytes)) // _SUB * _SUB)
    TS = S if ts >= S else ts
    return TS, TB, TH


def _make_kernel(ts, tail_rows, unroll, use_scratch, vreg_carry, acc_shape):
    """Build the kernel body for a static tiling configuration."""

    def _group_sum(prob_ref, emb_ref, start, rows):
        # prob: (rows, TB, 1), emb: (rows, TB, TH) -> (TB, TH) f32 partial sum.
        p = prob_ref[pl.ds(start, rows), :, :].astype(jnp.float32)
        e = emb_ref[pl.ds(start, rows), :, :].astype(jnp.float32)
        return jnp.sum(p * e, axis=0)

    def _accumulate(prob_ref, emb_ref, acc_ref, rows):
        n_full = rows // _SUB
        tail = rows - n_full * _SUB
        loop_unroll = max(1, min(unroll, n_full)) if n_full > 0 else 1

        if vreg_carry:
            # Carry the (TB, TH) partial sum in vregs; touch VMEM acc once.
            part = jnp.zeros(acc_shape, jnp.float32)
            if n_full > 0:
                def body(i, acc):
                    start = pl.multiple_of(i * _SUB, _SUB)
                    return acc + _group_sum(prob_ref, emb_ref, start, _SUB)
                part = jax.lax.fori_loop(0, n_full, body, part, unroll=loop_unroll)
            if tail > 0:
                part = part + _group_sum(prob_ref, emb_ref, n_full * _SUB, tail)
            acc_ref[...] += part
        else:
            # Accumulator too large for vregs: update it per 8-row group.
            if n_full > 0:
                def body(i, carry):
                    start = pl.multiple_of(i * _SUB, _SUB)
                    acc_ref[...] += _group_sum(prob_ref, emb_ref, start, _SUB)
                    return carry
                jax.lax.fori_loop(0, n_full, body, 0, unroll=loop_unroll)
            if tail > 0:
                acc_ref[...] += _group_sum(prob_ref, emb_ref, n_full * _SUB, tail)

    def kernel(prob_ref, emb_ref, out_ref, *scratch):
        acc_ref = scratch[0] if use_scratch else out_ref
        s = pl.program_id(2)
        last = pl.num_programs(2) - 1

        @pl.when(s == 0)
        def _():
            acc_ref[...] = jnp.zeros_like(acc_ref)

        if tail_rows == ts:
            _accumulate(prob_ref, emb_ref, acc_ref, ts)
        else:
            # Static tail handling: full blocks run a mask-free path; only the
            # last seq block processes the (static) number of valid rows.
            @pl.when(s != last)
            def _():
                _accumulate(prob_ref, emb_ref, acc_ref, ts)

            @pl.when(s == last)
            def _():
                _accumulate(prob_ref, emb_ref, acc_ref, tail_rows)

        if use_scratch:
            @pl.when(s == last)
            def _():
                out_ref[...] = acc_ref[...].astype(out_ref.dtype)

    return kernel


@functools.partial(jax.jit, static_argnames=("block_target_bytes",))
def document_summary(probability, emb_document, *, block_target_bytes=None):
    """probability: [S, B], emb_document: [S, B, H] -> [B, H] (sum over S)."""
    S, B = probability.shape
    S2, B2, H = emb_document.shape
    assert (S, B) == (S2, B2), (probability.shape, emb_document.shape)

    out_dtype = jnp.result_type(probability.dtype, emb_document.dtype)
    emb_itemsize = jnp.dtype(emb_document.dtype).itemsize
    prob_itemsize = jnp.dtype(probability.dtype).itemsize
    out_itemsize = jnp.dtype(out_dtype).itemsize

    vmem_cap, multi_tc = _device_info()
    if block_target_bytes is None:
        block_target = (8 << 20) if vmem_cap <= (64 << 20) else (16 << 20)
    else:
        block_target = int(block_target_bytes)

    TS, TB, TH = _plan_tiles(S, B, H, emb_itemsize, prob_itemsize,
                             multi_tc, block_target)
    n_b, n_h, n_s = B // TB, H // TH, _cdiv(S, TS)
    tail_rows = S - (n_s - 1) * TS

    use_scratch = out_dtype != jnp.float32

    # Keep the running (TB, TH) f32 partial sum in vregs when it is small
    # enough (<= 16 vregs); otherwise accumulate into VMEM per 8-row group.
    acc_pad_bytes = _round_up(TB, _SUB) * _round_up(TH, 128) * 4
    vreg_carry = acc_pad_bytes <= (64 << 10)

    # Cap the inner unroll so the f32 emb tile + product don't spill vregs.
    group_vregs = 2 * _SUB * _cdiv(_round_up(TB, _SUB), _SUB) * _cdiv(_round_up(TH, 128), 128)
    unroll = max(1, min(4, 40 // max(1, group_vregs)))

    kernel = _make_kernel(TS, tail_rows, unroll, use_scratch, vreg_carry, (TB, TH))
    scratch_shapes = (pltpu.VMEM((TB, TH), jnp.float32),) if use_scratch else ()

    # VMEM budget: double-buffered emb/prob/out blocks (padded layout) + scratch.
    emb_block = TS * _round_up(TB, _SUB) * _round_up(TH, 128) * emb_itemsize
    prob_block = TS * _round_up(TB, _SUB) * 128 * prob_itemsize
    out_block = _round_up(TB, _SUB) * _round_up(TH, 128) * out_itemsize
    required = 2 * emb_block + 2 * prob_block + 2 * out_block
    required += acc_pad_bytes if use_scratch else 0
    cap = (vmem_cap * 3) // 4  # leave headroom below physical VMEM
    vmem_limit = min(cap, max((required * 3) // 2, 32 << 20))
    vmem_limit = max(vmem_limit, required + (2 << 20))

    # probability as [S, B, 1] so B sits on sublanes like the emb block; the
    # in-kernel lane broadcast is a cheap vbcst instead of a relayout.
    prob3 = probability.reshape(S, B, 1)

    grid_spec = pltpu.PrefetchScalarGridSpec(
        num_scalar_prefetch=0,
        grid=(n_b, n_h, n_s),
        in_specs=[
            pl.BlockSpec((TS, TB, 1), lambda b, h, s: (s, b, 0)),
            pl.BlockSpec((TS, TB, TH), lambda b, h, s: (s, b, h)),
        ],
        # Output block index is constant along the seq (reduction) axis, so it
        # stays resident in VMEM and acts as the accumulator.
        out_specs=pl.BlockSpec((TB, TH), lambda b, h, s: (b, h)),
        scratch_shapes=scratch_shapes,
    )

    return pl.pallas_call(
        kernel,
        out_shape=jax.ShapeDtypeStruct((B, H), out_dtype),
        grid_spec=grid_spec,
        compiler_params=pltpu.CompilerParams(
            dimension_semantics=("parallel", "parallel", "arbitrary"),
            vmem_limit_bytes=int(vmem_limit),
        ),
    )(prob3, emb_document)


if __name__ == "__main__":
    key = jax.random.PRNGKey(0)
    k1, k2, k3, k4 = jax.random.split(key, 4)

    # --- primary small test (matches module semantics) ---
    S, B, H = 8, 2, 32  # seq, batch, hidden
    probability = jax.random.uniform(k1, (S, B), dtype=jnp.float32)
    emb_document = jax.random.normal(k2, (S, B, H), dtype=jnp.float32)

    out = document_summary(probability, emb_document)
    out = jax.block_until_ready(out)
    ref = jnp.sum(probability[..., None] * emb_document, axis=0)
    assert out.shape == (B, H), out.shape
    assert jnp.allclose(out, ref, atol=1e-5, rtol=1e-5), "mismatch vs reference (f32)"

    # --- exercise the multi-block seq path (forced tiny block budget) ---
    S2_, B2_, H2_ = 100, 8, 256
    prob2 = jax.random.uniform(k3, (S2_, B2_), dtype=jnp.float32)
    emb2 = jax.random.normal(k4, (S2_, B2_, H2_), dtype=jnp.float32)
    out2 = jax.block_until_ready(
        document_summary(prob2, emb2, block_target_bytes=64 << 10))
    ref2 = jnp.sum(prob2[..., None] * emb2, axis=0)
    assert jnp.allclose(out2, ref2, atol=1e-4, rtol=1e-4), "mismatch (multi-block)"

    # --- exercise the narrow-output (f32 scratch accumulator) path ---
    prob3 = prob2.astype(jnp.bfloat16)
    emb3 = emb2.astype(jnp.bfloat16)
    out3 = jax.block_until_ready(
        document_summary(prob3, emb3, block_target_bytes=64 << 10))
    ref3 = jnp.sum(prob3.astype(jnp.float32)[..., None] * emb3.astype(jnp.float32),
                   axis=0)
    assert out3.dtype == jnp.bfloat16, out3.dtype
    assert jnp.allclose(out3.astype(jnp.float32), ref3, atol=1e-1, rtol=2e-2), \
        "mismatch (bf16)"

    print("KERNEL_OK")
</pallas_src>

<mosaic_0001>
module attributes {stable_mosaic.version = 11 : i64} {
  func.func @kernel(%arg0: i32, %arg1: i32, %arg2: i32, %arg3: memref<8x2x1xf32, #tpu.memory_space<vmem>>, %arg4: memref<8x2x32xf32, #tpu.memory_space<vmem>>, %arg5: memref<2x32xf32, #tpu.memory_space<vmem>>) attributes {dimension_semantics = [#tpu.dimension_semantics<parallel>, #tpu.dimension_semantics<parallel>, #tpu.dimension_semantics<arbitrary>], iteration_bounds = array<i64: 1, 1, 1>, scalar_prefetch = 0 : i64, scratch_operands = 0 : i64, tpu.core_type = #tpu.core_type<tc>, window_params = [{transform_indices = @transform_0, window_bounds = array<i64: 8, 2, 1>}, {transform_indices = @transform_1, window_bounds = array<i64: 8, 2, 32>}, {transform_indices = @transform_2, window_bounds = array<i64: 2, 32>}]} {
    %c0_i32 = arith.constant 0 : i32
    %0 = arith.cmpi eq, %arg2, %c0_i32 : i32
    %1 = arith.extui %0 : i1 to i32
    %c0_i32_0 = arith.constant 0 : i32
    %2 = arith.cmpi ne, %1, %c0_i32_0 : i32
    scf.if %2 {
      %cst_10 = arith.constant 0.000000e+00 : f32
      %17 = vector.broadcast %cst_10 : f32 to vector<2x32xf32>
      %c0_11 = arith.constant 0 : index
      %c0_12 = arith.constant 0 : index
      %18 = vector.load %arg5[%c0_11, %c0_12] : memref<2x32xf32, #tpu.memory_space<vmem>>, vector<2x32xf32>
      tpu.vector_store %arg5[%c0_11, %c0_12], %17 {strides = array<i32>} : memref<2x32xf32, #tpu.memory_space<vmem>>, vector<2x32xf32>,
    } else {
    }
    %cst = arith.constant 0.000000e+00 : f32
    %3 = vector.broadcast %cst : f32 to vector<2x32xf32>
    %c0_i32_1 = arith.constant 0 : i32
    %c8_i32 = arith.constant 8 : i32
    %4 = arith.muli %c0_i32_1, %c8_i32 : i32
    %5 = tpu.assume_multiple %4, 8 : i32
    %6 = arith.index_cast %5 : i32 to index
    %c0 = arith.constant 0 : index
    %c0_2 = arith.constant 0 : index
    %7 = vector.load %arg3[%6, %c0, %c0_2] : memref<8x2x1xf32, #tpu.memory_space<vmem>>, vector<8x2x1xf32>
    %8 = arith.index_cast %5 : i32 to index
    %c0_3 = arith.constant 0 : index
    %c0_4 = arith.constant 0 : index
    %9 = vector.load %arg4[%8, %c0_3, %c0_4] : memref<8x2x32xf32, #tpu.memory_space<vmem>>, vector<8x2x32xf32>
    %10 = vector.broadcast %7 : vector<8x2x1xf32> to vector<8x2x32xf32>
    %11 = arith.mulf %10, %9 : vector<8x2x32xf32>
    %cst_5 = arith.constant dense<0.000000e+00> : vector<2x32xf32>
    %12 = vector.multi_reduction <add>, %11, %cst_5 [0] : vector<8x2x32xf32> to vector<2x32xf32>
    %13 = arith.addf %3, %12 : vector<2x32xf32>
    %c1_i32 = arith.constant 1 : i32
    %c0_6 = arith.constant 0 : index
    %c0_7 = arith.constant 0 : index
    %14 = vector.load %arg5[%c0_6, %c0_7] : memref<2x32xf32, #tpu.memory_space<vmem>>, vector<2x32xf32>
    %15 = arith.addf %14, %13 : vector<2x32xf32>
    %c0_8 = arith.constant 0 : index
    %c0_9 = arith.constant 0 : index
    %16 = vector.load %arg5[%c0_8, %c0_9] : memref<2x32xf32, #tpu.memory_space<vmem>>, vector<2x32xf32>
    tpu.vector_store %arg5[%c0_8, %c0_9], %15 {strides = array<i32>} : memref<2x32xf32, #tpu.memory_space<vmem>>, vector<2x32xf32>,
    return
  }
  func.func @transform_0(%arg0: i32, %arg1: i32, %arg2: i32) -> (i32, i32, i32) {
    %c0_i32 = arith.constant 0 : i32
    %c0_i32_0 = arith.constant 0 : i32
    return %arg2, %arg0, %c0_i32 : i32, i32, i32
  }
  func.func @transform_1(%arg0: i32, %arg1: i32, %arg2: i32) -> (i32, i32, i32) {
    %c0_i32 = arith.constant 0 : i32
    return %arg2, %arg0, %arg1 : i32, i32, i32
  }
  func.func @transform_2(%arg0: i32, %arg1: i32, %arg2: i32) -> (i32, i32) {
    %c0_i32 = arith.constant 0 : i32
    return %arg0, %arg1 : i32, i32
  }
}

</mosaic_0001>

<llo_original>
// kernel: document_summary.1
$region0: #{document_summary.1}
  #allocation0 [shape = 'u32[]', space=smem, size = 0x4, offset = 0x4, fixed_abs, tag = 'smem constant byte address 0x4 - core index']
  #allocation1 [shape = 'u32[144,128]{1,0:T(1,128)}', space=vmem, size = 0x12000, scoped, tag = 'internal scratch']
  %s0 = inlined_call_operand.vmem [shape: f32[8,2,1], index: 0, kind: input, shape index: {}]
  %s1 = inlined_call_operand.vmem [shape: f32[8,2,32], index: 1, kind: input, shape index: {}]
  %s2 = inlined_call_operand.hbm [shape: f32[2,32], index: 2, kind: output, shape index: {}]
  %s3 = sld [smem:[#allocation0]]
  $region22: #{document_summary.1} parent=0
    _
  %s5 = ssub.s32 1, %s3
  %s6 = scalar_select 0, %s5, %s3
  $region1: #{document_summary.1} parent=0
    #allocation2 [shape = 'u8[1024]{0}', space=vmem, size = 0x400, scoped, tag = 'output window, operand 0, single buffered']
    #allocation3 [shape = 's32[1]{0}', space=sflag, size = 0x4, scoped, tag = 'scoped memory for document_summary.1']
    %7 = vsyncpa [#allocation3], 0
    // Predicated region
    $region2: #{document_summary.1} parent=1 // pred_check
      _
    $region3: #{document_summary.1} parent=1 // pred_check_branch
      %9 = sbr.rel (0) target = $region5
    $region4: #{document_summary.1} parent=1 // pred_region
      _
    $region5: #{document_summary.1} parent=1 // pred_fallthru
      _
    // Predicated region
    $region6: #{document_summary.1} parent=1 // pred_check
      _
    $region7: #{document_summary.1} parent=1 // pred_check_branch
      %11 = sbr.rel (0) target = $region9
    $region8: #{document_summary.1} parent=1 // pred_region
      _
    $region9: #{document_summary.1} parent=1 // pred_fallthru
      _
    %p12 = scmp.eq.s32.totalorder 0, 0
    // Predicated region
    $region10: #{document_summary.1} parent=1 // pred_check
      %p13 = pneg %p12
    $region11: #{document_summary.1} parent=1 // pred_check_branch
      %15 = sbr.rel (%p13) target = $region13
    $region12: #{document_summary.1} parent=1 // pred_region
      %vm16 = vcmask 254976
      %17 = vst.msk [vmem:[#allocation2] sm:$0x3] %vm16, 0.0
    $region13: #{document_summary.1} parent=1 // pred_fallthru
      _
    %s18 = smul.u32 0, 2
    %s19 = scalar_lea.vmem %s0, %s18
    %v20 = vld [vmem:[%s19] sm:$0x3]
    %v21 = vld [vmem:[%s19 + $0x2] sm:$0x3]
    %v22 = vld [vmem:[%s19 + $0x4] sm:$0x3]
    %v23 = vld [vmem:[%s19 + $0x6] sm:$0x3]
    %v24 = vld [vmem:[%s19 + $0x8] sm:$0x3]
    %v25 = vld [vmem:[%s19 + $0xa] sm:$0x3]
    %v26 = vld [vmem:[%s19 + $0xc] sm:$0x3]
    %v27 = vld [vmem:[%s19 + $0xe] sm:$0x3]
    %s28 = scalar_lea.vmem %s1, %s18
    %v29 = vld [vmem:[%s28] sm:$0x3]
    %v30 = vld [vmem:[%s28 + $0x2] sm:$0x3]
    %v31 = vld [vmem:[%s28 + $0x4] sm:$0x3]
    %v32 = vld [vmem:[%s28 + $0x6] sm:$0x3]
    %v33 = vld [vmem:[%s28 + $0x8] sm:$0x3]
    %v34 = vld [vmem:[%s28 + $0xa] sm:$0x3]
    %v35 = vld [vmem:[%s28 + $0xc] sm:$0x3]
    %v36 = vld [vmem:[%s28 + $0xe] sm:$0x3]
    %38 = vset.pattern.permute.xlu0 0
    %39 = vperm.xlu0 %38, %v20
    %v40 = vpop.permute.xlu0 %39
    %43 = vset.pattern.permute.xlu0 0
    %44 = vperm.xlu0 %43, %v21
    %v45 = vpop.permute.xlu0 %44
    %48 = vset.pattern.permute.xlu0 0
    %49 = vperm.xlu0 %48, %v22
    %v50 = vpop.permute.xlu0 %49
    %53 = vset.pattern.permute.xlu0 0
    %54 = vperm.xlu0 %53, %v23
    %v55 = vpop.permute.xlu0 %54
    %58 = vset.pattern.permute.xlu0 0
    %59 = vperm.xlu0 %58, %v24
    %v60 = vpop.permute.xlu0 %59
    %63 = vset.pattern.permute.xlu0 0
    %64 = vperm.xlu0 %63, %v25
    %v65 = vpop.permute.xlu0 %64
    %68 = vset.pattern.permute.xlu0 0
    %69 = vperm.xlu0 %68, %v26
    %v70 = vpop.permute.xlu0 %69
    %73 = vset.pattern.permute.xlu0 0
    %74 = vperm.xlu0 %73, %v27
    %v75 = vpop.permute.xlu0 %74
    %v77 = vmul.f32 %v40, %v29
    %v78 = vmul.f32 %v45, %v30
    %v79 = vmul.f32 %v50, %v31
    %v80 = vmul.f32 %v55, %v32
    %v81 = vmul.f32 %v60, %v33
    %v82 = vmul.f32 %v65, %v34
    %v83 = vmul.f32 %v70, %v35
    %v84 = vmul.f32 %v75, %v36
    %vm85 = vcmask 254976
    %v86 = vsel %vm85, %v77, 0.0
    %v87 = vsel %vm85, %v78, 0.0
    %v88 = vadd.f32 %v86, %v87
    %v89 = vsel %vm85, %v79, 0.0
    %v90 = vadd.f32 %v88, %v89
    %v91 = vsel %vm85, %v80, 0.0
    %v92 = vadd.f32 %v90, %v91
    %v93 = vsel %vm85, %v81, 0.0
    %v94 = vadd.f32 %v92, %v93
    %v95 = vsel %vm85, %v82, 0.0
    %v96 = vadd.f32 %v94, %v95
    %v97 = vsel %vm85, %v83, 0.0
    %v98 = vadd.f32 %v96, %v97
    %v99 = vsel %vm85, %v84, 0.0
    %v100 = vadd.f32 %v98, %v99
    %v101 = vadd.f32 %v100, 0.0
    %v102 = vld [vmem:[#allocation2] sm:$0x3]
    %v103 = vadd.f32 %v102, %v101
    %104 = vst.msk [vmem:[#allocation2] sm:$0x3] %vm85, %v103
    // Predicated region
    $region14: #{document_summary.1} parent=1 // pred_check
      _
    $region15: #{document_summary.1} parent=1 // pred_check_branch
      %106 = sbr.rel (0) target = $region17
    $region16: #{document_summary.1} parent=1 // pred_region
      %s108 = ssub.s32 32, 32
      %109 = vsyncadd [#allocation3], %s108
      %s111 = sshll.u32 [#allocation2], 4
      %s112 = int_to_ptr.vmem [resolvable:$true] %s111
      %114 = dma.vmem_to_hbm [thread:$0]  %s112, 32, %s2, [#allocation3]
    $region17: #{document_summary.1} parent=1 // pred_fallthru
      _
    // Predicated region
    $region18: #{document_summary.1} parent=1 // pred_check
      _
    $region19: #{document_summary.1} parent=1 // pred_check_branch
      %116 = sbr.rel (0) target = $region21
    $region20: #{document_summary.1} parent=1 // pred_region
      %117 = dma.done [#allocation3], 32
    $region21: #{document_summary.1} parent=1 // pred_fallthru
      _
    %118 = vsyncpa [#allocation3], 1

</llo_original>
